<compile_context>
chip_gen: v6e
topology: v6e:2x2x1
jax: 0.10.0
libtpu: 0.0.40
codegen_flags: <defaults>
</compile_context>

<pallas_src>
import jax
import jax.numpy as jnp
from jax.experimental import pallas as pl
from jax.experimental.pallas import tpu as pltpu


def _make_se_kernel(inv_hw):
    def se_block_kernel(x_ref, w1_ref, b1_ref, w2_ref, b2_ref, o_ref, acc_ref):
        # grid = (B, n_hw); axis 1 is the spatial reduction axis
        k = pl.program_id(1)

        @pl.when(k == 0)
        def _init():
            acc_ref[...] = jnp.zeros_like(acc_ref)

        # Partial channel sums for this spatial tile: (1, C, hw_tile) -> (1, C).
        # Lowered as VPU adds across the hw_tile/128 vreg columns plus one
        # cross-lane reduce per row group; hidden under the x DMA stream.
        acc_ref[...] += jnp.sum(x_ref[...], axis=-1)

        @pl.when(k == pl.num_programs(1) - 1)
        def _finalize():
            pooled = acc_ref[...] * inv_hw                                # (1, C) true mean
            h = jnp.dot(pooled, w1_ref[...],
                        preferred_element_type=jnp.float32) + b1_ref[...]  # (1, C//r)
            h = jnp.maximum(h, 0.0)                                        # ReLU
            s = jnp.dot(h, w2_ref[...],
                        preferred_element_type=jnp.float32) + b2_ref[...]  # (1, C)
            o_ref[...] = jax.nn.sigmoid(s)[None]                           # (1, 1, C)

    return se_block_kernel


def se_block_forward(x_nchw, w1, b1, w2, b2, *, x_block_bytes=2 * 1024 * 1024):
    """x_nchw: (B, C, H, W) float32. Returns (B, C, 1, 1) float32."""
    B, C, H, W = x_nchw.shape
    HW = H * W
    C_red = w1.shape[1]
    LANE = 128

    x3 = x_nchw.reshape(B, C, HW)

    # Spatial tile: multiple of 128 lanes, sized so one (1, C, hw_tile) f32 block
    # stays <= ~x_block_bytes. With double buffering this fits comfortably inside
    # the v5e 16 MiB scoped default and the v7x 32/64 MiB VMEM budget.
    max_elems = max(LANE, x_block_bytes // (C * 4))
    hw_tile = (max_elems // LANE) * LANE
    hw_tile = min(hw_tile, pl.cdiv(HW, LANE) * LANE)
    HW_pad = pl.cdiv(HW, hw_tile) * hw_tile
    if HW_pad != HW:
        # Zero-pad the tail tile; we accumulate raw sums and divide by the true
        # H*W at the end, so padded zeros do not bias the mean.
        x3 = jnp.pad(x3, ((0, 0), (0, 0), (0, HW_pad - HW)))
    n_hw = HW_pad // hw_tile

    cost = pl.CostEstimate(
        flops=B * C * HW + 2 * (B * C * C_red) * 2,
        transcendentals=B * C,
        bytes_accessed=(B * C * HW_pad + w1.size + b1.size + w2.size + b2.size
                        + B * C) * 4,
    )

    out = pl.pallas_call(
        _make_se_kernel(1.0 / float(HW)),
        out_shape=jax.ShapeDtypeStruct((B, 1, C), jnp.float32),
        grid_spec=pltpu.PrefetchScalarGridSpec(
            num_scalar_prefetch=0,
            grid=(B, n_hw),
            in_specs=[
                # streamed activation tile
                pl.BlockSpec((1, C, hw_tile), lambda b, k: (b, 0, k)),
                # weights/biases: constant index_map -> DMA'd once, VMEM-resident
                pl.BlockSpec((C, C_red), lambda b, k: (0, 0)),
                pl.BlockSpec((1, C_red), lambda b, k: (0, 0)),
                pl.BlockSpec((C_red, C), lambda b, k: (0, 0)),
                pl.BlockSpec((1, C), lambda b, k: (0, 0)),
            ],
            out_specs=pl.BlockSpec((1, 1, C), lambda b, k: (b, 0, 0)),
            scratch_shapes=[pltpu.VMEM((1, C), jnp.float32)],  # channel-sum accumulator
        ),
        compiler_params=pltpu.CompilerParams(
            dimension_semantics=("parallel", "arbitrary"),
            vmem_limit_bytes=32 * 1024 * 1024,
        ),
        cost_estimate=cost,
    )(x3, w1, b1, w2, b2)

    return out.reshape(B, C, 1, 1)


if __name__ == "__main__":
    # Small shapes consistent with the module: reduction_ratio=16 needs C >= 16
    B, C, H, W = 2, 64, 16, 16
    reduction_ratio = 16
    C_red = C // reduction_ratio  # 4

    key = jax.random.PRNGKey(0)
    kx, k1, k2, k3, k4 = jax.random.split(key, 5)

    x = jax.random.normal(kx, (B, C, H, W), dtype=jnp.float32)

    # Parameters mirror nn.Linear(C, C//r) and nn.Linear(C//r, C); stored
    # already transposed to (in, out) for the in-kernel matmuls.
    w1 = jax.random.normal(k1, (C, C_red), dtype=jnp.float32) * 0.1
    b1 = jax.random.normal(k2, (1, C_red), dtype=jnp.float32) * 0.1
    w2 = jax.random.normal(k3, (C_red, C), dtype=jnp.float32) * 0.1
    b2 = jax.random.normal(k4, (1, C), dtype=jnp.float32) * 0.1

    # Use a small x_block_bytes so the example actually exercises the gridded,
    # multi-step accumulation path (hw_tile=128 -> 2 spatial tiles).
    out = se_block_forward(x, w1, b1, w2, b2, x_block_bytes=32 * 1024)
    out = jax.block_until_ready(out)

    # Sanity check against a pure-JAX reference of the same forward pass.
    pooled_ref = jnp.mean(x, axis=(2, 3))
    h_ref = jnp.maximum(pooled_ref @ w1 + b1, 0.0)
    ref = jax.nn.sigmoid(h_ref @ w2 + b2).reshape(B, C, 1, 1)
    assert out.shape == (B, C, 1, 1)
    assert jnp.allclose(out, ref, atol=1e-5, rtol=1e-5)

    print("KERNEL_OK")
</pallas_src>

<mosaic_0001>
module attributes {stable_mosaic.version = 11 : i64} {
  func.func @se_block_kernel(%arg0: i32, %arg1: i32, %arg2: memref<1x64x128xf32, #tpu.memory_space<vmem>>, %arg3: memref<64x4xf32, #tpu.memory_space<vmem>>, %arg4: memref<1x4xf32, #tpu.memory_space<vmem>>, %arg5: memref<4x64xf32, #tpu.memory_space<vmem>>, %arg6: memref<1x64xf32, #tpu.memory_space<vmem>>, %arg7: memref<1x1x64xf32, #tpu.memory_space<vmem>>, %arg8: memref<1x64xf32, #tpu.memory_space<vmem>>) attributes {dimension_semantics = [#tpu.dimension_semantics<parallel>, #tpu.dimension_semantics<arbitrary>], iteration_bounds = array<i64: 2, 2>, scalar_prefetch = 0 : i64, scratch_operands = 1 : i64, tpu.core_type = #tpu.core_type<tc>, window_params = [{transform_indices = @transform_0, window_bounds = array<i64: 1, 64, 128>}, {pipeline_mode = #tpu.pipeline_mode<synchronous>, transform_indices = @transform_1, window_bounds = array<i64: 64, 4>}, {pipeline_mode = #tpu.pipeline_mode<synchronous>, transform_indices = @transform_2, window_bounds = array<i64: 1, 4>}, {pipeline_mode = #tpu.pipeline_mode<synchronous>, transform_indices = @transform_3, window_bounds = array<i64: 4, 64>}, {pipeline_mode = #tpu.pipeline_mode<synchronous>, transform_indices = @transform_4, window_bounds = array<i64: 1, 64>}, {transform_indices = @transform_5, window_bounds = array<i64: 1, 1, 64>}]} {
    %c0_i32 = arith.constant 0 : i32
    %0 = arith.cmpi eq, %arg1, %c0_i32 : i32
    %1 = arith.extui %0 : i1 to i32
    %c0_i32_0 = arith.constant 0 : i32
    %2 = arith.cmpi ne, %1, %c0_i32_0 : i32
    scf.if %2 {
      %cst_8 = arith.constant 0.000000e+00 : f32
      %11 = vector.broadcast %cst_8 : f32 to vector<1x64xf32>
      %c0_9 = arith.constant 0 : index
      %c0_10 = arith.constant 0 : index
      %12 = vector.load %arg8[%c0_9, %c0_10] : memref<1x64xf32, #tpu.memory_space<vmem>>, vector<1x64xf32>
      tpu.vector_store %arg8[%c0_9, %c0_10], %11 {strides = array<i32>} : memref<1x64xf32, #tpu.memory_space<vmem>>, vector<1x64xf32>,
    } else {
    }
    %c0 = arith.constant 0 : index
    %c0_1 = arith.constant 0 : index
    %3 = vector.load %arg8[%c0, %c0_1] : memref<1x64xf32, #tpu.memory_space<vmem>>, vector<1x64xf32>
    %c0_2 = arith.constant 0 : index
    %c0_3 = arith.constant 0 : index
    %c0_4 = arith.constant 0 : index
    %4 = vector.load %arg2[%c0_2, %c0_3, %c0_4] : memref<1x64x128xf32, #tpu.memory_space<vmem>>, vector<1x64x128xf32>
    %cst = arith.constant dense<0.000000e+00> : vector<1x64xf32>
    %5 = vector.multi_reduction <add>, %4, %cst [2] : vector<1x64x128xf32> to vector<1x64xf32>
    %6 = arith.addf %3, %5 : vector<1x64xf32>
    %c0_5 = arith.constant 0 : index
    %c0_6 = arith.constant 0 : index
    %7 = vector.load %arg8[%c0_5, %c0_6] : memref<1x64xf32, #tpu.memory_space<vmem>>, vector<1x64xf32>
    tpu.vector_store %arg8[%c0_5, %c0_6], %6 {strides = array<i32>} : memref<1x64xf32, #tpu.memory_space<vmem>>, vector<1x64xf32>,
    %c1_i32 = arith.constant 1 : i32
    %8 = arith.cmpi eq, %arg1, %c1_i32 : i32
    %9 = arith.extui %8 : i1 to i32
    %c0_i32_7 = arith.constant 0 : i32
    %10 = arith.cmpi ne, %9, %c0_i32_7 : i32
    scf.if %10 {
      %c0_8 = arith.constant 0 : index
      %c0_9 = arith.constant 0 : index
      %11 = vector.load %arg8[%c0_8, %c0_9] : memref<1x64xf32, #tpu.memory_space<vmem>>, vector<1x64xf32>
      %cst_10 = arith.constant 3.906250e-03 : f32
      %12 = vector.broadcast %cst_10 : f32 to vector<1x64xf32>
      %13 = arith.mulf %11, %12 : vector<1x64xf32>
      %c0_11 = arith.constant 0 : index
      %c0_12 = arith.constant 0 : index
      %14 = vector.load %arg3[%c0_11, %c0_12] : memref<64x4xf32, #tpu.memory_space<vmem>>, vector<64x4xf32>
      %cst_13 = arith.constant dense<0.000000e+00> : vector<1x4xf32>
      %15 = tpu.matmul %13, %14, %cst_13 {dimension_numbers = #tpu.dot_dimension_numbers<[1], [0], [0], [1], [0, 0, 1, 1], [], []>} : vector<1x64xf32>, vector<64x4xf32>, vector<1x4xf32> -> vector<1x4xf32>
      %c0_14 = arith.constant 0 : index
      %c0_15 = arith.constant 0 : index
      %16 = vector.load %arg4[%c0_14, %c0_15] : memref<1x4xf32, #tpu.memory_space<vmem>>, vector<1x4xf32>
      %17 = arith.addf %15, %16 : vector<1x4xf32>
      %cst_16 = arith.constant 0.000000e+00 : f32
      %18 = vector.broadcast %cst_16 : f32 to vector<1x4xf32>
      %19 = arith.maximumf %17, %18 : vector<1x4xf32>
      %c0_17 = arith.constant 0 : index
      %c0_18 = arith.constant 0 : index
      %20 = vector.load %arg5[%c0_17, %c0_18] : memref<4x64xf32, #tpu.memory_space<vmem>>, vector<4x64xf32>
      %cst_19 = arith.constant dense<0.000000e+00> : vector<1x64xf32>
      %21 = tpu.matmul %19, %20, %cst_19 {dimension_numbers = #tpu.dot_dimension_numbers<[1], [0], [0], [1], [0, 0, 1, 1], [], []>} : vector<1x4xf32>, vector<4x64xf32>, vector<1x64xf32> -> vector<1x64xf32>
      %c0_20 = arith.constant 0 : index
      %c0_21 = arith.constant 0 : index
      %22 = vector.load %arg6[%c0_20, %c0_21] : memref<1x64xf32, #tpu.memory_space<vmem>>, vector<1x64xf32>
      %23 = arith.addf %21, %22 : vector<1x64xf32>
      %24 = arith.negf %23 : vector<1x64xf32>
      %25 = math.exp %24 : vector<1x64xf32>
      %cst_22 = arith.constant 1.000000e+00 : f32
      %26 = vector.broadcast %cst_22 : f32 to vector<1x64xf32>
      %27 = arith.addf %26, %25 : vector<1x64xf32>
      %28 = arith.divf %26, %27 : vector<1x64xf32>
      %29 = vector.shape_cast %28 : vector<1x64xf32> to vector<1x1x64xf32>
      %c0_23 = arith.constant 0 : index
      %c0_24 = arith.constant 0 : index
      %c0_25 = arith.constant 0 : index
      %30 = vector.load %arg7[%c0_23, %c0_24, %c0_25] : memref<1x1x64xf32, #tpu.memory_space<vmem>>, vector<1x1x64xf32>
      tpu.vector_store %arg7[%c0_23, %c0_24, %c0_25], %29 {strides = array<i32>} : memref<1x1x64xf32, #tpu.memory_space<vmem>>, vector<1x1x64xf32>,
    } else {
    }
    return
  }
  func.func @transform_0(%arg0: i32, %arg1: i32) -> (i32, i32, i32) {
    %c0_i32 = arith.constant 0 : i32
    %c0_i32_0 = arith.constant 0 : i32
    return %arg0, %c0_i32, %arg1 : i32, i32, i32
  }
  func.func @transform_1(%arg0: i32, %arg1: i32) -> (i32, i32) {
    %c0_i32 = arith.constant 0 : i32
    %c0_i32_0 = arith.constant 0 : i32
    %c0_i32_1 = arith.constant 0 : i32
    return %c0_i32, %c0_i32_0 : i32, i32
  }
  func.func @transform_2(%arg0: i32, %arg1: i32) -> (i32, i32) {
    %c0_i32 = arith.constant 0 : i32
    %c0_i32_0 = arith.constant 0 : i32
    %c0_i32_1 = arith.constant 0 : i32
    return %c0_i32, %c0_i32_0 : i32, i32
  }
  func.func @transform_3(%arg0: i32, %arg1: i32) -> (i32, i32) {
    %c0_i32 = arith.constant 0 : i32
    %c0_i32_0 = arith.constant 0 : i32
    %c0_i32_1 = arith.constant 0 : i32
    return %c0_i32, %c0_i32_0 : i32, i32
  }
  func.func @transform_4(%arg0: i32, %arg1: i32) -> (i32, i32) {
    %c0_i32 = arith.constant 0 : i32
    %c0_i32_0 = arith.constant 0 : i32
    %c0_i32_1 = arith.constant 0 : i32
    return %c0_i32, %c0_i32_0 : i32, i32
  }
  func.func @transform_5(%arg0: i32, %arg1: i32) -> (i32, i32, i32) {
    %c0_i32 = arith.constant 0 : i32
    %c0_i32_0 = arith.constant 0 : i32
    %c0_i32_1 = arith.constant 0 : i32
    return %arg0, %c0_i32, %c0_i32_0 : i32, i32, i32
  }
}

</mosaic_0001>

<llo_original>
// kernel: tpu_custom_call.1
$region0: #{tpu_custom_call.1}
  #allocation0 [shape = 'u32[]', space=smem, size = 0x4, offset = 0x4, fixed_abs, tag = 'smem constant byte address 0x4 - core index']
  #allocation1 [shape = 'u32[144,128]{1,0:T(1,128)}', space=vmem, size = 0x12000, scoped, tag = 'internal scratch']
  #allocation2 [shape = 'f32[1,64]{1,0:T(1,128)}', space=vmem, size = 0x200, scoped, tag = 'scratch operand']
  %s0 = inlined_call_operand.hbm [shape: f32[2,64,256], index: 0, kind: input, shape index: {}]
  %s1 = inlined_call_operand.vmem [shape: f32[64,4], index: 1, kind: input, shape index: {}]
  %s2 = inlined_call_operand.vmem [shape: f32[1,4], index: 2, kind: input, shape index: {}]
  %s3 = inlined_call_operand.vmem [shape: f32[4,64], index: 3, kind: input, shape index: {}]
  %s4 = inlined_call_operand.vmem [shape: f32[1,64], index: 4, kind: input, shape index: {}]
  %s5 = inlined_call_operand.hbm [shape: f32[2,1,64], index: 5, kind: output, shape index: {}]
  %s6 = sld [smem:[#allocation0]]
  $region65: #{tpu_custom_call.1} parent=0
    _
  %s8 = ssub.s32 1, %s6
  %s9 = scalar_select 0, %s8, %s6
  $region1: #{tpu_custom_call.1} parent=0
    #allocation3 [shape = 'u8[65536]{0}', space=vmem, size = 0x10000, scoped, tag = 'input window, operand 0']
    #allocation4 [shape = 's32[2]{0}', space=sflag, size = 0x8, scoped, tag = 'scoped memory for tpu_custom_call.1']
    #allocation5 [shape = 's32[2]{0}', space=sflag, size = 0x8, scoped, tag = 'scoped memory for tpu_custom_call.1']
    #allocation6 [shape = 'u8[1024]{0}', space=vmem, size = 0x400, scoped, tag = 'output window, operand 0']
    %10 = vsyncpa [#allocation4], 0
    %s11 = scalar_lea.sflag [#allocation4], 1
    %12 = vsyncpa %s11, 0
    %13 = vsyncpa [#allocation5], 0
    %s14 = scalar_lea.sflag [#allocation5], 1
    %15 = vsyncpa %s14, 0
    loop: start=0, step=1, limit=6
    $region2: #{tpu_custom_call.1} parent=1 // loop_pre_header
      _
    $region3: #{tpu_custom_call.1} parent=1 // loop_header
      %s17 = sphi 0, %s21
      %p18 = scmp.ge.s32.totalorder %s17, 6
      %s24 = sphi 0, %s36
      %s25 = sphi 0, %s32
      %s26 = sphi 0, %s24
      %s27 = sphi 0, %s25
      %s28 = sphi 0, %s26
      %s29 = sphi 0, %s27
      %s41 = sphi 0, %s43
      %s44 = sphi 0, %s41
      %s45 = sphi 0, %s44
      %s61 = sphi 0, %s45
      %s65 = sphi 0, %s65
      %s67 = sphi 0, %s65
      %s68 = sphi 0, %s67
      %s82 = sphi 0, %s68
      %s86 = sphi 0, %s86
      %s88 = sphi 0, %s86
      %s89 = sphi 0, %s88
      %s103 = sphi 0, %s89
      %s107 = sphi 0, %s107
      %s109 = sphi 0, %s107
      %s110 = sphi 0, %s109
      %s124 = sphi 0, %s110
      %s128 = sphi 0, %s128
      %s130 = sphi 0, %s128
      %s131 = sphi 0, %s130
      %s145 = sphi 0, %s131
      %s151 = sphi 0, %s153
      %s154 = sphi 0, %s151
      %s155 = sphi 0, %s154
      %s171 = sphi 0, %s155
    $region4: #{tpu_custom_call.1} parent=1 // loop_header_branch
      %20 = sbr.rel (%p18) target = $region8
    $region5: #{tpu_custom_call.1} parent=1 // loop_body
      %s22 = ssub.s32 %s17, 1
      %s23 = ssub.s32 %s17, 2
      %s30 = sadd.s32 1, %s25
      %p31 = scmp.ge.s32.totalorder %s30, 2
      %s32 = scalar_select %p31, 0, %s30
      %s33 = sadd.s32 1, %s24
      %s34 = scalar_select %p31, %s33, %s24
      %p35 = scmp.ge.s32.totalorder %s34, 2
      %s36 = scalar_select %p35, 0, %s34
      %s37 = ssub.s32 %s24, %s36
      %s38 = ssub.s32 %s25, %s32
      %s39 = sor.u32 %s37, %s38
      %p40 = scmp.eq.s32.totalorder %s39, 0
      %s42 = sadd.s32 %s41, 1
      %s43 = scalar_select %p40, %s41, %s42
      %p46 = pneg %p40
      %p47 = scmp.eq.s32.totalorder %s17, 3
      %p48 = por %p46, %p47
      %p49 = scmp.ne.s32.totalorder %s41, %s44
      %p50 = scmp.eq.s32.totalorder %s17, 0
      %p51 = por %p49, %p50
      %p52 = scmp.ne.s32.totalorder %s41, %s44
      %p53 = scmp.eq.s32.totalorder %s22, 3
      %p54 = por %p52, %p53
      %p55 = scmp.ne.s32.totalorder %s44, %s45
      %p56 = scmp.eq.s32.totalorder %s22, 0
      %p57 = por %p55, %p56
      %p58 = scmp.ne.s32.totalorder %s44, %s45
      %p59 = scmp.eq.s32.totalorder %s23, 3
      %p60 = por %p58, %p59
      %p62 = scmp.ne.s32.totalorder %s45, %s61
      %p63 = scmp.eq.s32.totalorder %s23, 0
      %p64 = por %p62, %p63
      %s66 = sadd.s32 %s65, 1
      %p69 = scmp.eq.s32.totalorder %s17, 3
      %p70 = scmp.ne.s32.totalorder %s65, %s67
      %p71 = scmp.eq.s32.totalorder %s17, 0
      %p72 = por %p70, %p71
      %p73 = scmp.ne.s32.totalorder %s65, %s67
      %p74 = scmp.eq.s32.totalorder %s22, 3
      %p75 = por %p73, %p74
      %p76 = scmp.ne.s32.totalorder %s67, %s68
      %p77 = scmp.eq.s32.totalorder %s22, 0
      %p78 = por %p76, %p77
      %p79 = scmp.ne.s32.totalorder %s67, %s68
      %p80 = scmp.eq.s32.totalorder %s23, 3
      %p81 = por %p79, %p80
      %p83 = scmp.ne.s32.totalorder %s68, %s82
      %p84 = scmp.eq.s32.totalorder %s23, 0
      %p85 = por %p83, %p84
      %s87 = sadd.s32 %s86, 1
      %p90 = scmp.eq.s32.totalorder %s17, 3
      %p91 = scmp.ne.s32.totalorder %s86, %s88
      %p92 = scmp.eq.s32.totalorder %s17, 0
      %p93 = por %p91, %p92
      %p94 = scmp.ne.s32.totalorder %s86, %s88
      %p95 = scmp.eq.s32.totalorder %s22, 3
      %p96 = por %p94, %p95
      %p97 = scmp.ne.s32.totalorder %s88, %s89
      %p98 = scmp.eq.s32.totalorder %s22, 0
      %p99 = por %p97, %p98
      %p100 = scmp.ne.s32.totalorder %s88, %s89
      %p101 = scmp.eq.s32.totalorder %s23, 3
      %p102 = por %p100, %p101
      %p104 = scmp.ne.s32.totalorder %s89, %s103
      %p105 = scmp.eq.s32.totalorder %s23, 0
      %p106 = por %p104, %p105
      %s108 = sadd.s32 %s107, 1
      %p111 = scmp.eq.s32.totalorder %s17, 3
      %p112 = scmp.ne.s32.totalorder %s107, %s109
      %p113 = scmp.eq.s32.totalorder %s17, 0
      %p114 = por %p112, %p113
      %p115 = scmp.ne.s32.totalorder %s107, %s109
      %p116 = scmp.eq.s32.totalorder %s22, 3
      %p117 = por %p115, %p116
      %p118 = scmp.ne.s32.totalorder %s109, %s110
      %p119 = scmp.eq.s32.totalorder %s22, 0
      %p120 = por %p118, %p119
      %p121 = scmp.ne.s32.totalorder %s109, %s110
      %p122 = scmp.eq.s32.totalorder %s23, 3
      %p123 = por %p121, %p122
      %p125 = scmp.ne.s32.totalorder %s110, %s124
      %p126 = scmp.eq.s32.totalorder %s23, 0
      %p127 = por %p125, %p126
      %s129 = sadd.s32 %s128, 1
      %p132 = scmp.eq.s32.totalorder %s17, 3
      %p133 = scmp.ne.s32.totalorder %s128, %s130
      %p134 = scmp.eq.s32.totalorder %s17, 0
      %p135 = por %p133, %p134
      %p136 = scmp.ne.s32.totalorder %s128, %s130
      %p137 = scmp.eq.s32.totalorder %s22, 3
      %p138 = por %p136, %p137
      %p139 = scmp.ne.s32.totalorder %s130, %s131
      %p140 = scmp.eq.s32.totalorder %s22, 0
      %p141 = por %p139, %p140
      %p142 = scmp.ne.s32.totalorder %s130, %s131
      %p143 = scmp.eq.s32.totalorder %s23, 3
      %p144 = por %p142, %p143
      %p146 = scmp.ne.s32.totalorder %s131, %s145
      %p147 = scmp.eq.s32.totalorder %s23, 0
      %p148 = por %p146, %p147
      %s149 = ssub.s32 %s24, %s36
      %p150 = scmp.eq.s32.totalorder %s149, 0
      %s152 = sadd.s32 %s151, 1
      %s153 = scalar_select %p150, %s151, %s152
      %p156 = pneg %p150
      %p157 = scmp.eq.s32.totalorder %s17, 3
      %p158 = por %p156, %p157
      %p159 = scmp.ne.s32.totalorder %s151, %s154
      %p160 = scmp.eq.s32.totalorder %s17, 0
      %p161 = por %p159, %p160
      %p162 = scmp.ne.s32.totalorder %s151, %s154
      %p163 = scmp.eq.s32.totalorder %s22, 3
      %p164 = por %p162, %p163
      %p165 = scmp.ne.s32.totalorder %s154, %s155
      %p166 = scmp.eq.s32.totalorder %s22, 0
      %p167 = por %p165, %p166
      %p168 = scmp.ne.s32.totalorder %s154, %s155
      %p169 = scmp.eq.s32.totalorder %s23, 3
      %p170 = por %p168, %p169
      %p172 = scmp.ne.s32.totalorder %s155, %s171
      %p173 = scmp.eq.s32.totalorder %s23, 0
      %p174 = por %p172, %p173
      %p175 = scmp.le.s32.totalorder 1, %s17
      %p176 = scmp.lt.s32.totalorder %s17, 5
      %p177 = pnand %p175, %p176
      %p178 = pneg %p177
      // Predicated region
      $region9: #{tpu_custom_call.1} parent=5 // pred_check
        _
      $region10: #{tpu_custom_call.1} parent=5 // pred_check_branch
        %180 = sbr.rel (%p177) target = $region12
      $region11: #{tpu_custom_call.1} parent=5 // pred_region
        %s181 = ssub.s32 %s17, 1
        // Predicated region
        $region13: #{tpu_custom_call.1} parent=11 // pred_check
          %p182 = pneg %p78
        $region14: #{tpu_custom_call.1} parent=11 // pred_check_branch
          %184 = sbr.rel (%p182) target = $region16
        $region15: #{tpu_custom_call.1} parent=11 // pred_region
          _
        $region16: #{tpu_custom_call.1} parent=11 // pred_fallthru
          _
        // Predicated region
        $region17: #{tpu_custom_call.1} parent=11 // pred_check
          %p185 = pneg %p99
        $region18: #{tpu_custom_call.1} parent=11 // pred_check_branch
          %187 = sbr.rel (%p185) target = $region20
        $region19: #{tpu_custom_call.1} parent=11 // pred_region
          _
        $region20: #{tpu_custom_call.1} parent=11 // pred_fallthru
          _
        // Predicated region
        $region21: #{tpu_custom_call.1} parent=11 // pred_check
          %p188 = pneg %p120
        $region22: #{tpu_custom_call.1} parent=11 // pred_check_branch
          %190 = sbr.rel (%p188) target = $region24
        $region23: #{tpu_custom_call.1} parent=11 // pred_region
          _
        $region24: #{tpu_custom_call.1} parent=11 // pred_fallthru
          _
        // Predicated region
        $region25: #{tpu_custom_call.1} parent=11 // pred_check
          %p191 = pneg %p141
        $region26: #{tpu_custom_call.1} parent=11 // pred_check_branch
          %193 = sbr.rel (%p191) target = $region28
        $region27: #{tpu_custom_call.1} parent=11 // pred_region
          _
        $region28: #{tpu_custom_call.1} parent=11 // pred_fallthru
          _
      $region12: #{tpu_custom_call.1} parent=5 // pred_fallthru
        _
      %p194 = scmp.lt.s32.totalorder %s17, 4
      // Predicated region
      $region29: #{tpu_custom_call.1} parent=5 // pred_check
        %p195 = pneg %p194
      $region30: #{tpu_custom_call.1} parent=5 // pred_check_branch
        %197 = sbr.rel (%p195) target = $region32
      $region31: #{tpu_custom_call.1} parent=5 // pred_region
        // Predicated region
        $region33: #{tpu_custom_call.1} parent=31 // pred_check
          %p198 = pneg %p51
        $region34: #{tpu_custom_call.1} parent=31 // pred_check_branch
          %200 = sbr.rel (%p198) target = $region36
        $region35: #{tpu_custom_call.1} parent=31 // pred_region
          %s201 = sand.u32 %s41, 1
          %s202 = scalar_lea.sflag [#allocation4], %s201
          %s203 = sand.u32 %s41, 1
          %s204 = smul.addr %s203, 64
          %s205 = scalar_lea.vmem [#allocation3], %s204
          %s207 = ssub.s32 1024, 1024
          %208 = vsyncadd %s202, %s207
          %s209 = smul.addr %s24, 16
          %s210 = sadd.s32 %s25, %s209
          %s211 = smul.addr %s210, 128
          %s212 = scalar_lea.hbm %s0, %s211
          %s213 = sshll.u32 %s205, 4
          %s214 = int_to_ptr.vmem [resolvable:$true] %s213
          %219 = dma.hbm_to_vmem [thread:$0]  %s212, 1024, %s214, %s202, 256, 128, 8
        $region36: #{tpu_custom_call.1} parent=31 // pred_fallthru
          _
      $region32: #{tpu_custom_call.1} parent=5 // pred_fallthru
        _
      %p220 = scmp.le.s32.totalorder 1, %s17
      %p221 = scmp.lt.s32.totalorder %s17, 5
      %p222 = pnand %p220, %p221
      %p223 = pneg %p222
      // Predicated region
      $region37: #{tpu_custom_call.1} parent=5 // pred_check
        _
      $region38: #{tpu_custom_call.1} parent=5 // pred_check_branch
        %225 = sbr.rel (%p222) target = $region40
      $region39: #{tpu_custom_call.1} parent=5 // pred_region
        %s226 = ssub.s32 %s17, 1
        %s227 = sand.u32 %s44, 1
        %s228 = scalar_lea.sflag [#allocation4], %s227
        %s229 = sand.u32 %s44, 1
        %s230 = smul.addr %s229, 64
        %s231 = scalar_lea.vmem [#allocation3], %s230
        // Predicated region
        $region41: #{tpu_custom_call.1} parent=39 // pred_check
          %p232 = pneg %p57
        $region42: #{tpu_custom_call.1} parent=39 // pred_check_branch
          %234 = sbr.rel (%p232) target = $region44
        $region43: #{tpu_custom_call.1} parent=39 // pred_region
          %235 = dma.done %s228, 1024
        $region44: #{tpu_custom_call.1} parent=39 // pred_fallthru
          _
        %s236 = sand.u32 %s44, 1
        %s237 = scalar_lea.sflag [#allocation4], %s236
        %s238 = sand.u32 %s44, 1
        %s239 = smul.addr %s238, 64
        %s240 = scalar_lea.vmem [#allocation3], %s239
        %p241 = pneg %p57
        %p242 = pneg %p54
        %p243 = pneg %p78
        %p244 = pneg %p75
        %p245 = pneg %p99
        %p246 = pneg %p96
        %p247 = pneg %p120
        %p248 = pneg %p117
        %p249 = pneg %p141
        %p250 = pneg %p138
        %p251 = pneg %p167
        %p252 = pneg %p164
        %s253 = sand.u32 %s154, 1
        %s254 = scalar_lea.sflag [#allocation5], %s253
        %s255 = sand.u32 %s154, 1
        %s256 = scalar_lea.vmem [#allocation6], %s255
        %p257 = scmp.eq.s32.totalorder %s27, 0
        // Predicated region
        $region45: #{tpu_custom_call.1} parent=39 // pred_check
          %p258 = pneg %p257
        $region46: #{tpu_custom_call.1} parent=39 // pred_check_branch
          %260 = sbr.rel (%p258) target = $region48
        $region47: #{tpu_custom_call.1} parent=39 // pred_region
          %vm261 = vcmask 516096
          %262 = vst.msk [vmem:[#allocation2] sm:$0x1] %vm261, 0.0
        $region48: #{tpu_custom_call.1} parent=39 // pred_fallthru
          _
        %v263 = vld [vmem:[#allocation2] sm:$0x1]
        %v264 = vld [vmem:[%s231] sm:$0xff]
        %v265 = vld [vmem:[%s231 + $0x8] sm:$0xff]
        %v266 = vld [vmem:[%s231 + $0x10] sm:$0xff]
        %v267 = vld [vmem:[%s231 + $0x18] sm:$0xff]
        %v268 = vld [vmem:[%s231 + $0x20] sm:$0xff]
        %v269 = vld [vmem:[%s231 + $0x28] sm:$0xff]
        %v270 = vld [vmem:[%s231 + $0x30] sm:$0xff]
        %v271 = vld [vmem:[%s231 + $0x38] sm:$0xff]
        %272 = vadd.xlane.f32.xlu0 %v264
        %v273 = vpop.xlane.xlu0 %272
        %274 = vadd.xlane.f32.xlu0 %v265
        %v275 = vpop.xlane.xlu0 %274
        %276 = vadd.xlane.f32.xlu0 %v266
        %v277 = vpop.xlane.xlu0 %276
        %278 = vadd.xlane.f32.xlu0 %v267
        %v279 = vpop.xlane.xlu0 %278
        %280 = vadd.xlane.f32.xlu0 %v268
        %v281 = vpop.xlane.xlu0 %280
        %282 = vadd.xlane.f32.xlu0 %v269
        %v283 = vpop.xlane.xlu0 %282
        %284 = vadd.xlane.f32.xlu0 %v270
        %v285 = vpop.xlane.xlu0 %284
        %286 = vadd.xlane.f32.xlu0 %v271
        %v287 = vpop.xlane.xlu0 %286
        %v296 = vlaneseq
        %v297 = vshrl.u32 %v296, 7
        %v298 = vsub.s32 0, %v297
        %v299 = vrot.slane %v273, %v298
        %v300 = vlaneseq
        %v301 = vshrl.u32 %v300, 7
        %v302 = vsub.s32 1, %v301
        %v303 = vrot.slane %v273, %v302
        %v304 = vlaneseq
        %v305 = vshrl.u32 %v304, 7
        %v306 = vsub.s32 2, %v305
        %v307 = vrot.slane %v273, %v306
        %v308 = vlaneseq
        %v309 = vshrl.u32 %v308, 7
        %v310 = vsub.s32 3, %v309
        %v311 = vrot.slane %v273, %v310
        %v312 = vlaneseq
        %v313 = vshrl.u32 %v312, 7
        %v314 = vsub.s32 4, %v313
        %v315 = vrot.slane %v273, %v314
        %v316 = vlaneseq
        %v317 = vshrl.u32 %v316, 7
        %v318 = vsub.s32 5, %v317
        %v319 = vrot.slane %v273, %v318
        %v320 = vlaneseq
        %v321 = vshrl.u32 %v320, 7
        %v322 = vsub.s32 6, %v321
        %v323 = vrot.slane %v273, %v322
        %v324 = vlaneseq
        %v325 = vshrl.u32 %v324, 7
        %v326 = vsub.s32 7, %v325
        %v327 = vrot.slane %v273, %v326
        %v328 = vlaneseq
        %v329 = vshrl.u32 %v328, 7
        %v330 = vsub.s32 0, %v329
        %v331 = vrot.slane %v275, %v330
        %v332 = vlaneseq
        %v333 = vshrl.u32 %v332, 7
        %v334 = vsub.s32 1, %v333
        %v335 = vrot.slane %v275, %v334
        %v336 = vlaneseq
        %v337 = vshrl.u32 %v336, 7
        %v338 = vsub.s32 2, %v337
        %v339 = vrot.slane %v275, %v338
        %v340 = vlaneseq
        %v341 = vshrl.u32 %v340, 7
        %v342 = vsub.s32 3, %v341
        %v343 = vrot.slane %v275, %v342
        %v344 = vlaneseq
        %v345 = vshrl.u32 %v344, 7
        %v346 = vsub.s32 4, %v345
        %v347 = vrot.slane %v275, %v346
        %v348 = vlaneseq
        %v349 = vshrl.u32 %v348, 7
        %v350 = vsub.s32 5, %v349
        %v351 = vrot.slane %v275, %v350
        %v352 = vlaneseq
        %v353 = vshrl.u32 %v352, 7
        %v354 = vsub.s32 6, %v353
        %v355 = vrot.slane %v275, %v354
        %v356 = vlaneseq
        %v357 = vshrl.u32 %v356, 7
        %v358 = vsub.s32 7, %v357
        %v359 = vrot.slane %v275, %v358
        %v360 = vlaneseq
        %v361 = vshrl.u32 %v360, 7
        %v362 = vsub.s32 0, %v361
        %v363 = vrot.slane %v277, %v362
        %v364 = vlaneseq
        %v365 = vshrl.u32 %v364, 7
        %v366 = vsub.s32 1, %v365
        %v367 = vrot.slane %v277, %v366
        %v368 = vlaneseq
        %v369 = vshrl.u32 %v368, 7
        %v370 = vsub.s32 2, %v369
        %v371 = vrot.slane %v277, %v370
        %v372 = vlaneseq
        %v373 = vshrl.u32 %v372, 7
        %v374 = vsub.s32 3, %v373
        %v375 = vrot.slane %v277, %v374
        %v376 = vlaneseq
        %v377 = vshrl.u32 %v376, 7
        %v378 = vsub.s32 4, %v377
        %v379 = vrot.slane %v277, %v378
        %v380 = vlaneseq
        %v381 = vshrl.u32 %v380, 7
        %v382 = vsub.s32 5, %v381
        %v383 = vrot.slane %v277, %v382
        %v384 = vlaneseq
        %v385 = vshrl.u32 %v384, 7
        %v386 = vsub.s32 6, %v385
        %v387 = vrot.slane %v277, %v386
        %v388 = vlaneseq
        %v389 = vshrl.u32 %v388, 7
        %v390 = vsub.s32 7, %v389
        %v391 = vrot.slane %v277, %v390
        %v392 = vlaneseq
        %v393 = vshrl.u32 %v392, 7
        %v394 = vsub.s32 0, %v393
        %v395 = vrot.slane %v279, %v394
        %v396 = vlaneseq
        %v397 = vshrl.u32 %v396, 7
        %v398 = vsub.s32 1, %v397
        %v399 = vrot.slane %v279, %v398
        %v400 = vlaneseq
        %v401 = vshrl.u32 %v400, 7
        %v402 = vsub.s32 2, %v401
        %v403 = vrot.slane %v279, %v402
        %v404 = vlaneseq
        %v405 = vshrl.u32 %v404, 7
        %v406 = vsub.s32 3, %v405
        %v407 = vrot.slane %v279, %v406
        %v408 = vlaneseq
        %v409 = vshrl.u32 %v408, 7
        %v410 = vsub.s32 4, %v409
        %v411 = vrot.slane %v279, %v410
        %v412 = vlaneseq
        %v413 = vshrl.u32 %v412, 7
        %v414 = vsub.s32 5, %v413
        %v415 = vrot.slane %v279, %v414
        %v416 = vlaneseq
        %v417 = vshrl.u32 %v416, 7
        %v418 = vsub.s32 6, %v417
        %v419 = vrot.slane %v279, %v418
        %v420 = vlaneseq
        %v421 = vshrl.u32 %v420, 7
        %v422 = vsub.s32 7, %v421
        %v423 = vrot.slane %v279, %v422
        %v424 = vlaneseq
        %v425 = vshrl.u32 %v424, 7
        %v426 = vsub.s32 0, %v425
        %v427 = vrot.slane %v281, %v426
        %v428 = vlaneseq
        %v429 = vshrl.u32 %v428, 7
        %v430 = vsub.s32 1, %v429
        %v431 = vrot.slane %v281, %v430
        %v432 = vlaneseq
        %v433 = vshrl.u32 %v432, 7
        %v434 = vsub.s32 2, %v433
        %v435 = vrot.slane %v281, %v434
        %v436 = vlaneseq
        %v437 = vshrl.u32 %v436, 7
        %v438 = vsub.s32 3, %v437
        %v439 = vrot.slane %v281, %v438
        %v440 = vlaneseq
        %v441 = vshrl.u32 %v440, 7
        %v442 = vsub.s32 4, %v441
        %v443 = vrot.slane %v281, %v442
        %v444 = vlaneseq
        %v445 = vshrl.u32 %v444, 7
        %v446 = vsub.s32 5, %v445
        %v447 = vrot.slane %v281, %v446
        %v448 = vlaneseq
        %v449 = vshrl.u32 %v448, 7
        %v450 = vsub.s32 6, %v449
        %v451 = vrot.slane %v281, %v450
        %v452 = vlaneseq
        %v453 = vshrl.u32 %v452, 7
        %v454 = vsub.s32 7, %v453
        %v455 = vrot.slane %v281, %v454
        %v456 = vlaneseq
        %v457 = vshrl.u32 %v456, 7
        %v458 = vsub.s32 0, %v457
        %v459 = vrot.slane %v283, %v458
        %v460 = vlaneseq
        %v461 = vshrl.u32 %v460, 7
        %v462 = vsub.s32 1, %v461
        %v463 = vrot.slane %v283, %v462
        %v464 = vlaneseq
        %v465 = vshrl.u32 %v464, 7
        %v466 = vsub.s32 2, %v465
        %v467 = vrot.slane %v283, %v466
        %v468 = vlaneseq
        %v469 = vshrl.u32 %v468, 7
        %v470 = vsub.s32 3, %v469
        %v471 = vrot.slane %v283, %v470
        %v472 = vlaneseq
        %v473 = vshrl.u32 %v472, 7
        %v474 = vsub.s32 4, %v473
        %v475 = vrot.slane %v283, %v474
        %v476 = vlaneseq
        %v477 = vshrl.u32 %v476, 7
        %v478 = vsub.s32 5, %v477
        %v479 = vrot.slane %v283, %v478
        %v480 = vlaneseq
        %v481 = vshrl.u32 %v480, 7
        %v482 = vsub.s32 6, %v481
        %v483 = vrot.slane %v283, %v482
        %v484 = vlaneseq
        %v485 = vshrl.u32 %v484, 7
        %v486 = vsub.s32 7, %v485
        %v487 = vrot.slane %v283, %v486
        %v488 = vlaneseq
        %v489 = vshrl.u32 %v488, 7
        %v490 = vsub.s32 0, %v489
        %v491 = vrot.slane %v285, %v490
        %v492 = vlaneseq
        %v493 = vshrl.u32 %v492, 7
        %v494 = vsub.s32 1, %v493
        %v495 = vrot.slane %v285, %v494
        %v496 = vlaneseq
        %v497 = vshrl.u32 %v496, 7
        %v498 = vsub.s32 2, %v497
        %v499 = vrot.slane %v285, %v498
        %v500 = vlaneseq
        %v501 = vshrl.u32 %v500, 7
        %v502 = vsub.s32 3, %v501
        %v503 = vrot.slane %v285, %v502
        %v504 = vlaneseq
        %v505 = vshrl.u32 %v504, 7
        %v506 = vsub.s32 4, %v505
        %v507 = vrot.slane %v285, %v506
        %v508 = vlaneseq
        %v509 = vshrl.u32 %v508, 7
        %v510 = vsub.s32 5, %v509
        %v511 = vrot.slane %v285, %v510
        %v512 = vlaneseq
        %v513 = vshrl.u32 %v512, 7
        %v514 = vsub.s32 6, %v513
        %v515 = vrot.slane %v285, %v514
        %v516 = vlaneseq
        %v517 = vshrl.u32 %v516, 7
        %v518 = vsub.s32 7, %v517
        %v519 = vrot.slane %v285, %v518
        %v520 = vlaneseq
        %v521 = vshrl.u32 %v520, 7
        %v522 = vsub.s32 0, %v521
        %v523 = vrot.slane %v287, %v522
        %v524 = vlaneseq
        %v525 = vshrl.u32 %v524, 7
        %v526 = vsub.s32 1, %v525
        %v527 = vrot.slane %v287, %v526
        %v528 = vlaneseq
        %v529 = vshrl.u32 %v528, 7
        %v530 = vsub.s32 2, %v529
        %v531 = vrot.slane %v287, %v530
        %v532 = vlaneseq
        %v533 = vshrl.u32 %v532, 7
        %v534 = vsub.s32 3, %v533
        %v535 = vrot.slane %v287, %v534
        %v536 = vlaneseq
        %v537 = vshrl.u32 %v536, 7
        %v538 = vsub.s32 4, %v537
        %v539 = vrot.slane %v287, %v538
        %v540 = vlaneseq
        %v541 = vshrl.u32 %v540, 7
        %v542 = vsub.s32 5, %v541
        %v543 = vrot.slane %v287, %v542
        %v544 = vlaneseq
        %v545 = vshrl.u32 %v544, 7
        %v546 = vsub.s32 6, %v545
        %v547 = vrot.slane %v287, %v546
        %v548 = vlaneseq
        %v549 = vshrl.u32 %v548, 7
        %v550 = vsub.s32 7, %v549
        %v551 = vrot.slane %v287, %v550
        %v552 = vcombine.low %v299, %v303
        %v553 = vcombine.low %v307, %v311
        %v554 = vcombine.low %v315, %v319
        %v555 = vcombine.low %v323, %v327
        %v557 = vunpack.c.l.s4 1966171168
        %v558 = vunpack.c.0.s8 %v557
        %v559 = vlaneseq
        %v560 = vshrl.u32 %v559, 7
        %v561 = vsub.s32 %v558, %v560
        %v562 = vrot.slane %v552, %v561
        %v564 = vunpack.c.l.s4 1966171168
        %v565 = vunpack.c.0.s8 %v564
        %v566 = vlaneseq
        %v567 = vshrl.u32 %v566, 7
        %v568 = vsub.s32 %v565, %v567
        %v569 = vrot.slane %v553, %v568
        %v571 = vunpack.c.l.s4 1966171168
        %v572 = vunpack.c.0.s8 %v571
        %v573 = vlaneseq
        %v574 = vshrl.u32 %v573, 7
        %v575 = vsub.s32 %v572, %v574
        %v576 = vrot.slane %v554, %v575
        %v578 = vunpack.c.l.s4 1966171168
        %v579 = vunpack.c.0.s8 %v578
        %v580 = vlaneseq
        %v581 = vshrl.u32 %v580, 7
        %v582 = vsub.s32 %v579, %v581
        %v583 = vrot.slane %v555, %v582
        %v584 = vcombine.low %v562, %v569
        %v585 = vcombine.low %v576, %v583
        %v587 = vunpack.c.l.s4 1966171168
        %v588 = vunpack.c.0.s8 %v587
        %v589 = vlaneseq
        %v590 = vshrl.u32 %v589, 7
        %v591 = vsub.s32 %v588, %v590
        %v592 = vrot.slane %v584, %v591
        %v594 = vunpack.c.l.s4 1966171168
        %v595 = vunpack.c.0.s8 %v594
        %v596 = vlaneseq
        %v597 = vshrl.u32 %v596, 7
        %v598 = vsub.s32 %v595, %v597
        %v599 = vrot.slane %v585, %v598
        %v600 = vcombine.low %v592, %v599
        %v601 = vcombine.low %v331, %v335
        %v602 = vcombine.low %v339, %v343
        %v603 = vcombine.low %v347, %v351
        %v604 = vcombine.low %v355, %v359
        %v606 = vunpack.c.l.s4 1966171168
        %v607 = vunpack.c.0.s8 %v606
        %v608 = vlaneseq
        %v609 = vshrl.u32 %v608, 7
        %v610 = vsub.s32 %v607, %v609
        %v611 = vrot.slane %v601, %v610
        %v613 = vunpack.c.l.s4 1966171168
        %v614 = vunpack.c.0.s8 %v613
        %v615 = vlaneseq
        %v616 = vshrl.u32 %v615, 7
        %v617 = vsub.s32 %v614, %v616
        %v618 = vrot.slane %v602, %v617
        %v620 = vunpack.c.l.s4 1966171168
        %v621 = vunpack.c.0.s8 %v620
        %v622 = vlaneseq
        %v623 = vshrl.u32 %v622, 7
        %v624 = vsub.s32 %v621, %v623
        %v625 = vrot.slane %v603, %v624
        %v627 = vunpack.c.l.s4 1966171168
        %v628 = vunpack.c.0.s8 %v627
        %v629 = vlaneseq
        %v630 = vshrl.u32 %v629, 7
        %v631 = vsub.s32 %v628, %v630
        %v632 = vrot.slane %v604, %v631
        %v633 = vcombine.low %v611, %v618
        %v634 = vcombine.low %v625, %v632
        %v636 = vunpack.c.l.s4 1966171168
        %v637 = vunpack.c.0.s8 %v636
        %v638 = vlaneseq
        %v639 = vshrl.u32 %v638, 7
        %v640 = vsub.s32 %v637, %v639
        %v641 = vrot.slane %v633, %v640
        %v643 = vunpack.c.l.s4 1966171168
        %v644 = vunpack.c.0.s8 %v643
        %v645 = vlaneseq
        %v646 = vshrl.u32 %v645, 7
        %v647 = vsub.s32 %v644, %v646
        %v648 = vrot.slane %v634, %v647
        %v649 = vcombine.low %v641, %v648
        %v650 = vcombine.low %v363, %v367
        %v651 = vcombine.low %v371, %v375
        %v652 = vcombine.low %v379, %v383
        %v653 = vcombine.low %v387, %v391
        %v655 = vunpack.c.l.s4 1966171168
        %v656 = vunpack.c.0.s8 %v655
        %v657 = vlaneseq
        %v658 = vshrl.u32 %v657, 7
        %v659 = vsub.s32 %v656, %v658
        %v660 = vrot.slane %v650, %v659
        %v662 = vunpack.c.l.s4 1966171168
        %v663 = vunpack.c.0.s8 %v662
        %v664 = vlaneseq
        %v665 = vshrl.u32 %v664, 7
        %v666 = vsub.s32 %v663, %v665
        %v667 = vrot.slane %v651, %v666
        %v669 = vunpack.c.l.s4 1966171168
        %v670 = vunpack.c.0.s8 %v669
        %v671 = vlaneseq
        %v672 = vshrl.u32 %v671, 7
        %v673 = vsub.s32 %v670, %v672
        %v674 = vrot.slane %v652, %v673
        %v676 = vunpack.c.l.s4 1966171168
        %v677 = vunpack.c.0.s8 %v676
        %v678 = vlaneseq
        %v679 = vshrl.u32 %v678, 7
        %v680 = vsub.s32 %v677, %v679
        %v681 = vrot.slane %v653, %v680
        %v682 = vcombine.low %v660, %v667
        %v683 = vcombine.low %v674, %v681
        %v685 = vunpack.c.l.s4 1966171168
        %v686 = vunpack.c.0.s8 %v685
        %v687 = vlaneseq
        %v688 = vshrl.u32 %v687, 7
        %v689 = vsub.s32 %v686, %v688
        %v690 = vrot.slane %v682, %v689
        %v692 = vunpack.c.l.s4 1966171168
        %v693 = vunpack.c.0.s8 %v692
        %v694 = vlaneseq
        %v695 = vshrl.u32 %v694, 7
        %v696 = vsub.s32 %v693, %v695
        %v697 = vrot.slane %v683, %v696
        %v698 = vcombine.low %v690, %v697
        %v699 = vcombine.low %v395, %v399
        %v700 = vcombine.low %v403, %v407
        %v701 = vcombine.low %v411, %v415
        %v702 = vcombine.low %v419, %v423
        %v704 = vunpack.c.l.s4 1966171168
        %v705 = vunpack.c.0.s8 %v704
        %v706 = vlaneseq
        %v707 = vshrl.u32 %v706, 7
        %v708 = vsub.s32 %v705, %v707
        %v709 = vrot.slane %v699, %v708
        %v711 = vunpack.c.l.s4 1966171168
        %v712 = vunpack.c.0.s8 %v711
        %v713 = vlaneseq
        %v714 = vshrl.u32 %v713, 7
        %v715 = vsub.s32 %v712, %v714
        %v716 = vrot.slane %v700, %v715
        %v718 = vunpack.c.l.s4 1966171168
        %v719 = vunpack.c.0.s8 %v718
        %v720 = vlaneseq
        %v721 = vshrl.u32 %v720, 7
        %v722 = vsub.s32 %v719, %v721
        %v723 = vrot.slane %v701, %v722
        %v725 = vunpack.c.l.s4 1966171168
        %v726 = vunpack.c.0.s8 %v725
        %v727 = vlaneseq
        %v728 = vshrl.u32 %v727, 7
        %v729 = vsub.s32 %v726, %v728
        %v730 = vrot.slane %v702, %v729
        %v731 = vcombine.low %v709, %v716
        %v732 = vcombine.low %v723, %v730
        %v734 = vunpack.c.l.s4 1966171168
        %v735 = vunpack.c.0.s8 %v734
        %v736 = vlaneseq
        %v737 = vshrl.u32 %v736, 7
        %v738 = vsub.s32 %v735, %v737
        %v739 = vrot.slane %v731, %v738
        %v741 = vunpack.c.l.s4 1966171168
        %v742 = vunpack.c.0.s8 %v741
        %v743 = vlaneseq
        %v744 = vshrl.u32 %v743, 7
        %v745 = vsub.s32 %v742, %v744
        %v746 = vrot.slane %v732, %v745
        %v747 = vcombine.low %v739, %v746
        %v748 = vcombine.low %v427, %v431
        %v749 = vcombine.low %v435, %v439
        %v750 = vcombine.low %v443, %v447
        %v751 = vcombine.low %v451, %v455
        %v753 = vunpack.c.l.s4 1966171168
        %v754 = vunpack.c.0.s8 %v753
        %v755 = vlaneseq
        %v756 = vshrl.u32 %v755, 7
        %v757 = vsub.s32 %v754, %v756
        %v758 = vrot.slane %v748, %v757
        %v760 = vunpack.c.l.s4 1966171168
        %v761 = vunpack.c.0.s8 %v760
        %v762 = vlaneseq
        %v763 = vshrl.u32 %v762, 7
        %v764 = vsub.s32 %v761, %v763
        %v765 = vrot.slane %v749, %v764
        %v767 = vunpack.c.l.s4 1966171168
        %v768 = vunpack.c.0.s8 %v767
        %v769 = vlaneseq
        %v770 = vshrl.u32 %v769, 7
        %v771 = vsub.s32 %v768, %v770
        %v772 = vrot.slane %v750, %v771
        %v774 = vunpack.c.l.s4 1966171168
        %v775 = vunpack.c.0.s8 %v774
        %v776 = vlaneseq
        %v777 = vshrl.u32 %v776, 7
        %v778 = vsub.s32 %v775, %v777
        %v779 = vrot.slane %v751, %v778
        %v780 = vcombine.low %v758, %v765
        %v781 = vcombine.low %v772, %v779
        %v783 = vunpack.c.l.s4 1966171168
        %v784 = vunpack.c.0.s8 %v783
        %v785 = vlaneseq
        %v786 = vshrl.u32 %v785, 7
        %v787 = vsub.s32 %v784, %v786
        %v788 = vrot.slane %v780, %v787
        %v790 = vunpack.c.l.s4 1966171168
        %v791 = vunpack.c.0.s8 %v790
        %v792 = vlaneseq
        %v793 = vshrl.u32 %v792, 7
        %v794 = vsub.s32 %v791, %v793
        %v795 = vrot.slane %v781, %v794
        %v796 = vcombine.low %v788, %v795
        %v797 = vcombine.low %v459, %v463
        %v798 = vcombine.low %v467, %v471
        %v799 = vcombine.low %v475, %v479
        %v800 = vcombine.low %v483, %v487
        %v802 = vunpack.c.l.s4 1966171168
        %v803 = vunpack.c.0.s8 %v802
        %v804 = vlaneseq
        %v805 = vshrl.u32 %v804, 7
        %v806 = vsub.s32 %v803, %v805
        %v807 = vrot.slane %v797, %v806
        %v809 = vunpack.c.l.s4 1966171168
        %v810 = vunpack.c.0.s8 %v809
        %v811 = vlaneseq
        %v812 = vshrl.u32 %v811, 7
        %v813 = vsub.s32 %v810, %v812
        %v814 = vrot.slane %v798, %v813
        %v816 = vunpack.c.l.s4 1966171168
        %v817 = vunpack.c.0.s8 %v816
        %v818 = vlaneseq
        %v819 = vshrl.u32 %v818, 7
        %v820 = vsub.s32 %v817, %v819
        %v821 = vrot.slane %v799, %v820
        %v823 = vunpack.c.l.s4 1966171168
        %v824 = vunpack.c.0.s8 %v823
        %v825 = vlaneseq
        %v826 = vshrl.u32 %v825, 7
        %v827 = vsub.s32 %v824, %v826
        %v828 = vrot.slane %v800, %v827
        %v829 = vcombine.low %v807, %v814
        %v830 = vcombine.low %v821, %v828
        %v832 = vunpack.c.l.s4 1966171168
        %v833 = vunpack.c.0.s8 %v832
        %v834 = vlaneseq
        %v835 = vshrl.u32 %v834, 7
        %v836 = vsub.s32 %v833, %v835
        %v837 = vrot.slane %v829, %v836
        %v839 = vunpack.c.l.s4 1966171168
        %v840 = vunpack.c.0.s8 %v839
        %v841 = vlaneseq
        %v842 = vshrl.u32 %v841, 7
        %v843 = vsub.s32 %v840, %v842
        %v844 = vrot.slane %v830, %v843
        %v845 = vcombine.low %v837, %v844
        %v846 = vcombine.low %v491, %v495
        %v847 = vcombine.low %v499, %v503
        %v848 = vcombine.low %v507, %v511
        %v849 = vcombine.low %v515, %v519
        %v851 = vunpack.c.l.s4 1966171168
        %v852 = vunpack.c.0.s8 %v851
        %v853 = vlaneseq
        %v854 = vshrl.u32 %v853, 7
        %v855 = vsub.s32 %v852, %v854
        %v856 = vrot.slane %v846, %v855
        %v858 = vunpack.c.l.s4 1966171168
        %v859 = vunpack.c.0.s8 %v858
        %v860 = vlaneseq
        %v861 = vshrl.u32 %v860, 7
        %v862 = vsub.s32 %v859, %v861
        %v863 = vrot.slane %v847, %v862
        %v865 = vunpack.c.l.s4 1966171168
        %v866 = vunpack.c.0.s8 %v865
        %v867 = vlaneseq
        %v868 = vshrl.u32 %v867, 7
        %v869 = vsub.s32 %v866, %v868
        %v870 = vrot.slane %v848, %v869
        %v872 = vunpack.c.l.s4 1966171168
        %v873 = vunpack.c.0.s8 %v872
        %v874 = vlaneseq
        %v875 = vshrl.u32 %v874, 7
        %v876 = vsub.s32 %v873, %v875
        %v877 = vrot.slane %v849, %v876
        %v878 = vcombine.low %v856, %v863
        %v879 = vcombine.low %v870, %v877
        %v881 = vunpack.c.l.s4 1966171168
        %v882 = vunpack.c.0.s8 %v881
        %v883 = vlaneseq
        %v884 = vshrl.u32 %v883, 7
        %v885 = vsub.s32 %v882, %v884
        %v886 = vrot.slane %v878, %v885
        %v888 = vunpack.c.l.s4 1966171168
        %v889 = vunpack.c.0.s8 %v888
        %v890 = vlaneseq
        %v891 = vshrl.u32 %v890, 7
        %v892 = vsub.s32 %v889, %v891
        %v893 = vrot.slane %v879, %v892
        %v894 = vcombine.low %v886, %v893
        %v895 = vcombine.low %v523, %v527
        %v896 = vcombine.low %v531, %v535
        %v897 = vcombine.low %v539, %v543
        %v898 = vcombine.low %v547, %v551
        %v900 = vunpack.c.l.s4 1966171168
        %v901 = vunpack.c.0.s8 %v900
        %v902 = vlaneseq
        %v903 = vshrl.u32 %v902, 7
        %v904 = vsub.s32 %v901, %v903
        %v905 = vrot.slane %v895, %v904
        %v907 = vunpack.c.l.s4 1966171168
        %v908 = vunpack.c.0.s8 %v907
        %v909 = vlaneseq
        %v910 = vshrl.u32 %v909, 7
        %v911 = vsub.s32 %v908, %v910
        %v912 = vrot.slane %v896, %v911
        %v914 = vunpack.c.l.s4 1966171168
        %v915 = vunpack.c.0.s8 %v914
        %v916 = vlaneseq
        %v917 = vshrl.u32 %v916, 7
        %v918 = vsub.s32 %v915, %v917
        %v919 = vrot.slane %v897, %v918
        %v921 = vunpack.c.l.s4 1966171168
        %v922 = vunpack.c.0.s8 %v921
        %v923 = vlaneseq
        %v924 = vshrl.u32 %v923, 7
        %v925 = vsub.s32 %v922, %v924
        %v926 = vrot.slane %v898, %v925
        %v927 = vcombine.low %v905, %v912
        %v928 = vcombine.low %v919, %v926
        %v930 = vunpack.c.l.s4 1966171168
        %v931 = vunpack.c.0.s8 %v930
        %v932 = vlaneseq
        %v933 = vshrl.u32 %v932, 7
        %v934 = vsub.s32 %v931, %v933
        %v935 = vrot.slane %v927, %v934
        %v937 = vunpack.c.l.s4 1966171168
        %v938 = vunpack.c.0.s8 %v937
        %v939 = vlaneseq
        %v940 = vshrl.u32 %v939, 7
        %v941 = vsub.s32 %v938, %v940
        %v942 = vrot.slane %v928, %v941
        %v943 = vcombine.low %v935, %v942
        %944 = vset.pattern.permute.xlu0 0
        %945 = vperm.xlu0 %944, %v600
        %v946 = vpop.permute.xlu0 %945
        %947 = vset.pattern.permute.xlu0 0
        %948 = vperm.xlu0 %947, %v649
        %v949 = vpop.permute.xlu0 %948
        %950 = vset.pattern.permute.xlu0 0
        %951 = vperm.xlu0 %950, %v698
        %v952 = vpop.permute.xlu0 %951
        %953 = vset.pattern.permute.xlu0 0
        %954 = vperm.xlu0 %953, %v747
        %v955 = vpop.permute.xlu0 %954
        %956 = vset.pattern.permute.xlu0 0
        %957 = vperm.xlu0 %956, %v796
        %v958 = vpop.permute.xlu0 %957
        %959 = vset.pattern.permute.xlu0 0
        %960 = vperm.xlu0 %959, %v845
        %v961 = vpop.permute.xlu0 %960
        %962 = vset.pattern.permute.xlu0 0
        %963 = vperm.xlu0 %962, %v894
        %v964 = vpop.permute.xlu0 %963
        %965 = vset.pattern.permute.xlu0 0
        %966 = vperm.xlu0 %965, %v943
        %v967 = vpop.permute.xlu0 %966
        %v968 = vlaneseq
        %v969 = vand.u32 %v968, 127
        %v970 = vlaneseq
        %v971 = vshrl.u32 %v970, 7
        %v972 = vsub.s32 %v969, %v971
        %v973 = vrot.slane %v946, %v972
        %v974 = vadd.s32 %v969, 4294967288
        %v975 = vlaneseq
        %v976 = vshrl.u32 %v975, 7
        %v977 = vsub.s32 %v974, %v976
        %v978 = vrot.slane %v949, %v977
        %vm979 = vcmask 130112
        %v980 = vsel %vm979, %v978, %v973
        %v981 = vadd.s32 %v969, 4294967280
        %v982 = vlaneseq
        %v983 = vshrl.u32 %v982, 7
        %v984 = vsub.s32 %v981, %v983
        %v985 = vrot.slane %v952, %v984
        %vm986 = vcmask 195712
        %v987 = vsel %vm986, %v985, %v980
        %v988 = vadd.s32 %v969, 4294967272
        %v989 = vlaneseq
        %v990 = vshrl.u32 %v989, 7
        %v991 = vsub.s32 %v988, %v990
        %v992 = vrot.slane %v955, %v991
        %vm993 = vcmask 261312
        %v994 = vsel %vm993, %v992, %v987
        %v995 = vadd.s32 %v969, 4294967264
        %v996 = vlaneseq
        %v997 = vshrl.u32 %v996, 7
        %v998 = vsub.s32 %v995, %v997
        %v999 = vrot.slane %v958, %v998
        %vm1000 = vcmask 326912
        %v1001 = vsel %vm1000, %v999, %v994
        %v1002 = vadd.s32 %v969, 4294967256
        %v1003 = vlaneseq
        %v1004 = vshrl.u32 %v1003, 7
        %v1005 = vsub.s32 %v1002, %v1004
        %v1006 = vrot.slane %v961, %v1005
        %vm1007 = vcmask 392512
        %v1008 = vsel %vm1007, %v1006, %v1001
        %v1009 = vadd.s32 %v969, 4294967248
        %v1010 = vlaneseq
        %v1011 = vshrl.u32 %v1010, 7
        %v1012 = vsub.s32 %v1009, %v1011
        %v1013 = vrot.slane %v964, %v1012
        %vm1014 = vcmask 458112
        %v1015 = vsel %vm1014, %v1013, %v1008
        %v1016 = vadd.s32 %v969, 4294967240
        %v1017 = vlaneseq
        %v1018 = vshrl.u32 %v1017, 7
        %v1019 = vsub.s32 %v1016, %v1018
        %v1020 = vrot.slane %v967, %v1019
        %vm1021 = vcmask 523712
        %v1022 = vsel %vm1021, %v1020, %v1015
        %v1024 = vunpack.c.l.s4 1966171168
        %v1025 = vunpack.c.0.s8 %v1024
        %v1026 = vlaneseq
        %v1027 = vshrl.u32 %v1026, 7
        %v1028 = vsub.s32 %v1025, %v1027
        %v1029 = vrot.slane %v1022, %v1028
        %v1031 = vunpack.c.l.s4 1966171168
        %v1032 = vunpack.c.0.s8 %v1031
        %v1033 = vlaneseq
        %v1034 = vshrl.u32 %v1033, 7
        %v1035 = vsub.s32 %v1032, %v1034
        %v1036 = vrot.slane %v1029, %v1035
        %v1038 = vadd.f32 %v263, %v1036
        %vm1039 = vcmask 516096
        %1040 = vst.msk [vmem:[#allocation2] sm:$0x1] %vm1039, %v1038
        %p1041 = scmp.eq.s32.totalorder %s27, 1
        // Predicated region
        $region49: #{tpu_custom_call.1} parent=39 // pred_check
          %p1042 = pneg %p1041
        $region50: #{tpu_custom_call.1} parent=39 // pred_check_branch
          %1044 = sbr.rel (%p1042) target = $region52
        $region51: #{tpu_custom_call.1} parent=39 // pred_region
          %v1045 = vld [vmem:[#allocation2] sm:$0x1]
          %v1046 = vmul.f32 %v1045, 0.00390625
          %v1047 = vld [vmem:[%s1] sm:$0xff]
          %v1048 = vld [vmem:[%s1 + $0x8] sm:$0xff]
          %v1049 = vld [vmem:[%s1 + $0x10] sm:$0xff]
          %v1050 = vld [vmem:[%s1 + $0x18] sm:$0xff]
          %v1051 = vld [vmem:[%s1 + $0x20] sm:$0xff]
          %v1052 = vld [vmem:[%s1 + $0x28] sm:$0xff]
          %v1053 = vld [vmem:[%s1 + $0x30] sm:$0xff]
          %v1054 = vld [vmem:[%s1 + $0x38] sm:$0xff]
          %v1055 = vld [vmem:[%s2] sm:$0x1]
          %vm1056 = vcmask 523264
          %v1058 = vsel %vm1056, %v1046, 0
          %1060 = vmatprep.subr.mxu0 0.0
          %1061 = vmatpush1.msra.mxu0 0.0
          %1062 = vmatprep.subr.mxu0 0.0
          %1063 = vmatpush1.msra.mxu0 0.0
          %1064 = vmatprep.subr.mxu0 0.0
          %1065 = vmatpush1.msra.mxu0 0.0
          %1066 = vmatprep.subr.mxu0 0.0
          %1067 = vmatpush1.msra.mxu0 0.0
          %1068 = vmatprep.subr.mxu0 0.0
          %1069 = vmatpush1.msra.mxu0 0.0
          %1070 = vmatprep.subr.mxu0 0.0
          %1071 = vmatpush1.msra.mxu0 0.0
          %1072 = vmatprep.subr.mxu0 0.0
          %1073 = vmatpush1.msra.mxu0 0.0
          %1074 = vmatprep.subr.mxu0 0.0
          %1075 = vmatpush1.msra.mxu0 0.0
          %1076 = vmatprep.subr.mxu0 0.0
          %1077 = vmatpush1.msra.mxu0 %v1054
          %1078 = vmatprep.subr.mxu0 0.0
          %1079 = vmatpush1.msra.mxu0 %v1053
          %1080 = vmatprep.subr.mxu0 0.0
          %1081 = vmatpush1.msra.mxu0 %v1052
          %1082 = vmatprep.subr.mxu0 0.0
          %1083 = vmatpush1.msra.mxu0 %v1051
          %1084 = vmatprep.subr.mxu0 0.0
          %1085 = vmatpush1.msra.mxu0 %v1050
          %1086 = vmatprep.subr.mxu0 0.0
          %1087 = vmatpush1.msra.mxu0 %v1049
          %1088 = vmatprep.subr.mxu0 0.0
          %1089 = vmatpush1.msra.mxu0 %v1048
          %1090 = vmatprep.subr.mxu0 0.0
          %1091 = vmatpush1.msra.mxu0 %v1047
          %1092 = vmatprep.subr.mxu0 0.0
          %1093 = vmatpush2.msra.mxu0 0.0
          %1094 = vmatprep.subr.mxu0 0.0
          %1095 = vmatpush2.msra.mxu0 0.0
          %1096 = vmatprep.subr.mxu0 0.0
          %1097 = vmatpush2.msra.mxu0 0.0
          %1098 = vmatprep.subr.mxu0 0.0
          %1099 = vmatpush2.msra.mxu0 0.0
          %1100 = vmatprep.subr.mxu0 0.0
          %1101 = vmatpush2.msra.mxu0 0.0
          %1102 = vmatprep.subr.mxu0 0.0
          %1103 = vmatpush2.msra.mxu0 0.0
          %1104 = vmatprep.subr.mxu0 0.0
          %1105 = vmatpush2.msra.mxu0 0.0
          %1106 = vmatprep.subr.mxu0 0.0
          %1107 = vmatpush2.msra.mxu0 0.0
          %1108 = vmatprep.subr.mxu0 0.0
          %1109 = vmatpush2.msra.mxu0 0.0
          %1110 = vmatprep.subr.mxu0 0.0
          %1111 = vmatpush2.msra.mxu0 0.0
          %1112 = vmatprep.subr.mxu0 0.0
          %1113 = vmatpush2.msra.mxu0 0.0
          %1114 = vmatprep.subr.mxu0 0.0
          %1115 = vmatpush2.msra.mxu0 0.0
          %1116 = vmatprep.subr.mxu0 0.0
          %1117 = vmatpush2.msra.mxu0 0.0
          %1118 = vmatprep.subr.mxu0 0.0
          %1119 = vmatpush2.msra.mxu0 0.0
          %1120 = vmatprep.subr.mxu0 0.0
          %1121 = vmatpush2.msra.mxu0 0.0
          %1122 = vmatprep.subr.mxu0 0.0
          %1123 = vmatpush2.msra.mxu0 0.0
          %1124 = vmatprep.mubr.f32.mxu0 0.0
          %1125 = vmatmul.mubr.f32.gmra.mxu0 %v1058
          %v1126 = vpop.f32.mrf.mxu0
          %v1127 = vadd.f32 %v1055, %v1126
          %v1128 = vpop.f32.mrf.mxu0
          %1129 = vdwg.mxu0
          %v1130 = vmax.f32 %v1127, 0.0
          %v1131 = vld [vmem:[%s3] sm:$0xf]
          %v1132 = vld [vmem:[%s4] sm:$0x1]
          %vm1133 = vcmask 31744
          %v1135 = vsel %vm1133, %v1130, 0
          %vm1137 = vcmask 1043456
          %v1139 = vsel %vm1137, %v1131, 0
          %1141 = vmatprep.subr.mxu0 0.0
          %1142 = vmatpush1.msra.mxu0 0.0
          %1143 = vmatprep.subr.mxu0 0.0
          %1144 = vmatpush1.msra.mxu0 0.0
          %1145 = vmatprep.subr.mxu0 0.0
          %1146 = vmatpush1.msra.mxu0 0.0
          %1147 = vmatprep.subr.mxu0 0.0
          %1148 = vmatpush1.msra.mxu0 0.0
          %1149 = vmatprep.subr.mxu0 0.0
          %1150 = vmatpush1.msra.mxu0 0.0
          %1151 = vmatprep.subr.mxu0 0.0
          %1152 = vmatpush1.msra.mxu0 0.0
          %1153 = vmatprep.subr.mxu0 0.0
          %1154 = vmatpush1.msra.mxu0 0.0
          %1155 = vmatprep.subr.mxu0 0.0
          %1156 = vmatpush1.msra.mxu0 0.0
          %1157 = vmatprep.subr.mxu0 0.0
          %1158 = vmatpush1.msra.mxu0 0.0
          %1159 = vmatprep.subr.mxu0 0.0
          %1160 = vmatpush1.msra.mxu0 0.0
          %1161 = vmatprep.subr.mxu0 0.0
          %1162 = vmatpush1.msra.mxu0 0.0
          %1163 = vmatprep.subr.mxu0 0.0
          %1164 = vmatpush1.msra.mxu0 0.0
          %1165 = vmatprep.subr.mxu0 0.0
          %1166 = vmatpush1.msra.mxu0 0.0
          %1167 = vmatprep.subr.mxu0 0.0
          %1168 = vmatpush1.msra.mxu0 0.0
          %1169 = vmatprep.subr.mxu0 0.0
          %1170 = vmatpush1.msra.mxu0 0.0
          %1171 = vmatprep.subr.mxu0 0.0
          %1172 = vmatpush1.msra.mxu0 %v1139
          %1173 = vmatprep.subr.mxu0 0.0
          %1174 = vmatpush2.msra.mxu0 0.0
          %1175 = vmatprep.subr.mxu0 0.0
          %1176 = vmatpush2.msra.mxu0 0.0
          %1177 = vmatprep.subr.mxu0 0.0
          %1178 = vmatpush2.msra.mxu0 0.0
          %1179 = vmatprep.subr.mxu0 0.0
          %1180 = vmatpush2.msra.mxu0 0.0
          %1181 = vmatprep.subr.mxu0 0.0
          %1182 = vmatpush2.msra.mxu0 0.0
          %1183 = vmatprep.subr.mxu0 0.0
          %1184 = vmatpush2.msra.mxu0 0.0
          %1185 = vmatprep.subr.mxu0 0.0
          %1186 = vmatpush2.msra.mxu0 0.0
          %1187 = vmatprep.subr.mxu0 0.0
          %1188 = vmatpush2.msra.mxu0 0.0
          %1189 = vmatprep.subr.mxu0 0.0
          %1190 = vmatpush2.msra.mxu0 0.0
          %1191 = vmatprep.subr.mxu0 0.0
          %1192 = vmatpush2.msra.mxu0 0.0
          %1193 = vmatprep.subr.mxu0 0.0
          %1194 = vmatpush2.msra.mxu0 0.0
          %1195 = vmatprep.subr.mxu0 0.0
          %1196 = vmatpush2.msra.mxu0 0.0
          %1197 = vmatprep.subr.mxu0 0.0
          %1198 = vmatpush2.msra.mxu0 0.0
          %1199 = vmatprep.subr.mxu0 0.0
          %1200 = vmatpush2.msra.mxu0 0.0
          %1201 = vmatprep.subr.mxu0 0.0
          %1202 = vmatpush2.msra.mxu0 0.0
          %1203 = vmatprep.subr.mxu0 0.0
          %1204 = vmatpush2.msra.mxu0 0.0
          %1205 = vmatprep.mubr.f32.mxu0 0.0
          %1206 = vmatmul.mubr.f32.gmra.mxu0 %v1135
          %v1207 = vpop.f32.mrf.mxu0
          %v1208 = vadd.f32 %v1132, %v1207
          %v1209 = vpop.f32.mrf.mxu0
          %1210 = vdwg.mxu0
          %v1211 = vxor.u32 %v1208, 2147483648
          %v1212 = vmul.f32 %v1211, 1.442695
          %v1213 = vpow.pop %v1212
          %v1214 = vadd.f32 %v1213, 1.0
          %v1215 = vrcp.pop %v1214
          %v1216 = vmul.f32 1.0, %v1215
          %1217 = vst.msk [vmem:[%s256] sm:$0x1] %vm1039, %v1216
        $region52: #{tpu_custom_call.1} parent=39 // pred_fallthru
          _
        %s1218 = sand.u32 %s154, 1
        %s1219 = scalar_lea.sflag [#allocation5], %s1218
        %s1220 = sand.u32 %s154, 1
        %s1221 = scalar_lea.vmem [#allocation6], %s1220
        // Predicated region
        $region53: #{tpu_custom_call.1} parent=39 // pred_check
          %p1222 = pneg %p164
        $region54: #{tpu_custom_call.1} parent=39 // pred_check_branch
          %1224 = sbr.rel (%p1222) target = $region56
        $region55: #{tpu_custom_call.1} parent=39 // pred_region
          %s1226 = ssub.s32 16, 16
          %1227 = vsyncadd %s1219, %s1226
          %s1228 = smul.addr %s26, 16
          %s1229 = scalar_lea.hbm %s5, %s1228
          %s1231 = sshll.u32 %s1221, 4
          %s1232 = int_to_ptr.vmem [resolvable:$true] %s1231
          %1234 = dma.vmem_to_hbm [thread:$0]  %s1232, 16, %s1229, %s1219
        $region56: #{tpu_custom_call.1} parent=39 // pred_fallthru
          _
      $region40: #{tpu_custom_call.1} parent=5 // pred_fallthru
        _
      %p1235 = scmp.le.s32.totalorder 2, %s17
      // Predicated region
      $region57: #{tpu_custom_call.1} parent=5 // pred_check
        %p1236 = pneg %p1235
      $region58: #{tpu_custom_call.1} parent=5 // pred_check_branch
        %1238 = sbr.rel (%p1236) target = $region60
      $region59: #{tpu_custom_call.1} parent=5 // pred_region
        %s1239 = ssub.s32 %s17, 2
        // Predicated region
        $region61: #{tpu_custom_call.1} parent=59 // pred_check
          %p1240 = pneg %p170
        $region62: #{tpu_custom_call.1} parent=59 // pred_check_branch
          %1242 = sbr.rel (%p1240) target = $region64
        $region63: #{tpu_custom_call.1} parent=59 // pred_region
          %s1243 = sand.u32 %s155, 1
          %s1244 = scalar_lea.sflag [#allocation5], %s1243
          %s1245 = sand.u32 %s155, 1
          %s1246 = scalar_lea.vmem [#allocation6], %s1245
          %1247 = dma.done %s1244, 16
        $region64: #{tpu_custom_call.1} parent=59 // pred_fallthru
          _
      $region60: #{tpu_custom_call.1} parent=5 // pred_fallthru
        _
    $region6: #{tpu_custom_call.1} parent=1 // loop_footer
      %s21 = sadd.s32 1, %s17
    $region7: #{tpu_custom_call.1} parent=1 // loop_footer_branch
      %16 = sbr.rel target = $region3
    $region8: #{tpu_custom_call.1} parent=1 // loop_exit
      _
    %1248 = vsyncpa [#allocation4], 1
    %s1249 = scalar_lea.sflag [#allocation4], 1
    %1250 = vsyncpa %s1249, 1
    %1251 = vsyncpa [#allocation5], 1
    %s1252 = scalar_lea.sflag [#allocation5], 1
    %1253 = vsyncpa %s1252, 1

</llo_original>
